<compile_context>
chip_gen: v5e
topology: v5e:2x2
jax: 0.10.0
libtpu: 0.0.40
codegen_flags: <defaults>
</compile_context>

<pallas_src>
import functools

import jax
import jax.numpy as jnp
from jax.experimental import pallas as pl
from jax.experimental.pallas import tpu as pltpu


# --------------------------------------------------------------------------- kernel
def _fused_mhsa_kernel(x_ref, wqkv_ref, bqkv_ref, wo_ref, bo_ref, o_ref,
                       *, num_heads):
    B, E = x_ref.shape
    V = wo_ref.shape[1]
    slab_width = o_ref.shape[1]
    H = num_heads
    Dh = E // H

    x = x_ref[...]                                                    # (B, E)

    # Fused Q/K/V projection: one MXU matmul against the concatenated weight.
    qkv = (jnp.dot(x, wqkv_ref[...], preferred_element_type=jnp.float32)
           + bqkv_ref[...])                                           # (B, 3E)

    # Fold the 1/head_dim score scale into Q once (module divides by head_dim,
    # not sqrt(head_dim) — matches the PyTorch source).
    q = qkv[:, 0 * E:1 * E] * (1.0 / Dh)                              # (B, E)
    k = qkv[:, 1 * E:2 * E]                                           # (B, E)
    v = qkv[:, 2 * E:3 * E]                                           # (B, E)

    # The module uses the head axis as the "sequence" axis: per batch row,
    # scores are (H, H) between head blocks.  H is tiny & static -> unroll,
    # keeping everything 2-D (static lane-block slices, no reshapes/transposes).
    q_blk = [q[:, h * Dh:(h + 1) * Dh] for h in range(H)]             # (B, Dh) each
    k_blk = [k[:, h * Dh:(h + 1) * Dh] for h in range(H)]
    v_blk = [v[:, h * Dh:(h + 1) * Dh] for h in range(H)]

    attn_blocks = []
    for i in range(H):
        # s_ij = <q_i, k_j> per batch row -> (B, 1) each (lane reduce, XLU).
        s = [jnp.sum(q_blk[i] * k_blk[j], axis=-1, keepdims=True)
             for j in range(H)]
        m = s[0]
        for j in range(1, H):
            m = jnp.maximum(m, s[j])
        e = [jnp.exp(s[j] - m) for j in range(H)]                     # EUP
        denom = e[0]
        for j in range(1, H):
            denom = denom + e[j]
        inv = pl.reciprocal(denom, approx=True)                       # EUP, no VALU div
        acc = (e[0] * inv) * v_blk[0]
        for j in range(1, H):
            acc = acc + (e[j] * inv) * v_blk[j]                       # (B, Dh)
        attn_blocks.append(acc)

    # Keep attention_output in vregs (no o_ref read-back) for the fc_out matmul.
    attn = jnp.concatenate(attn_blocks, axis=1)                       # (B, E)

    out = (jnp.dot(attn, wo_ref[...], preferred_element_type=jnp.float32)
           + bo_ref[...])                                             # (B, V)

    # Assemble the lane-dense slab [attn | out | pad] and store it once.
    pieces = [attn, out]
    if slab_width > E + V:                                            # static pad
        pieces.append(jnp.zeros((B, slab_width - (E + V)), jnp.float32))
    o_ref[...] = jnp.concatenate(pieces, axis=1)


# --------------------------------------------------------------------------- wrapper
def multi_head_self_attention(x, params, num_heads):
    """Mirrors MultiHeadSelfAttention.forward; returns (output, attention_output)."""
    B, E = x.shape
    V = params["bo"].shape[0]
    H = num_heads
    Dh = E // H

    # Concatenate the three projection weights/biases -> one (E, 3E) matmul.
    wqkv = jnp.concatenate(
        [params["wq_t"], params["wk_t"], params["wv_t"]], axis=1)     # (E, 3E)
    bqkv = jnp.concatenate(
        [params["bq"], params["bk"], params["bv"]], axis=0).reshape(1, 3 * E)
    wo = params["wo_t"]                                               # (E, V)
    bo = params["bo"].reshape(1, V)

    # Lane-dense packed output slab: [attn (E) | output (V) | zero pad] -> x128.
    slab_width = ((E + V + 127) // 128) * 128

    flops = 2 * B * E * (3 * E) + 4 * B * H * H * Dh + 2 * B * E * V
    transcendentals = B * H * H + B * H
    bytes_accessed = 4 * (B * E + E * 3 * E + 3 * E + E * V + V + B * slab_width)

    kernel = functools.partial(_fused_mhsa_kernel, num_heads=H)

    slab = pl.pallas_call(
        kernel,
        out_shape=jax.ShapeDtypeStruct((B, slab_width), jnp.float32),
        grid=(1,),
        in_specs=[
            pl.BlockSpec((B, E), lambda i: (0, 0)),
            pl.BlockSpec((E, 3 * E), lambda i: (0, 0)),
            pl.BlockSpec((1, 3 * E), lambda i: (0, 0)),
            pl.BlockSpec((E, V), lambda i: (0, 0)),
            pl.BlockSpec((1, V), lambda i: (0, 0)),
        ],
        out_specs=pl.BlockSpec((B, slab_width), lambda i: (0, 0)),
        compiler_params=pltpu.CompilerParams(
            dimension_semantics=("arbitrary",)),
        cost_estimate=pl.CostEstimate(
            flops=flops,
            transcendentals=transcendentals,
            bytes_accessed=bytes_accessed),
    )(x, wqkv, bqkv, wo, bo)

    attention_output = slab[:, :E]
    output = slab[:, E:E + V]
    return output, attention_output


# --------------------------------------------------------------------------- reference
def reference(x, params, num_heads):
    B, E = x.shape
    Dh = E // num_heads
    q = (x @ params["wq_t"] + params["bq"]).reshape(B, num_heads, Dh)
    k = (x @ params["wk_t"] + params["bk"]).reshape(B, num_heads, Dh)
    v = (x @ params["wv_t"] + params["bv"]).reshape(B, num_heads, Dh)
    s = jnp.einsum("bhd,bgd->bhg", q, k) / Dh
    w = jax.nn.softmax(s, axis=-1)
    attn = jnp.einsum("bhg,bgd->bhd", w, v).reshape(B, E)
    out = attn @ params["wo_t"] + params["bo"]
    return out, attn


# --------------------------------------------------------------------------- main
if __name__ == "__main__":
    embed_dim, num_heads, vocab_size = 32, 4, 64
    batch = 8

    key = jax.random.PRNGKey(0)
    ks = jax.random.split(key, 9)

    def init_linear(kw, kb, fan_in, fan_out):
        # PyTorch Linear stores weight as (out, in); emulate its uniform init.
        bound = 1.0 / jnp.sqrt(fan_in)
        w = jax.random.uniform(kw, (fan_out, fan_in), jnp.float32, -bound, bound)
        b = jax.random.uniform(kb, (fan_out,), jnp.float32, -bound, bound)
        return w.T, b  # pre-transpose to (in, out) for the kernel

    wq_t, bq = init_linear(ks[0], ks[1], embed_dim, embed_dim)
    wk_t, bk = init_linear(ks[2], ks[3], embed_dim, embed_dim)
    wv_t, bv = init_linear(ks[4], ks[5], embed_dim, embed_dim)
    wo_t, bo = init_linear(ks[6], ks[7], embed_dim, vocab_size)
    params = dict(wq_t=wq_t, bq=bq, wk_t=wk_t, bk=bk,
                  wv_t=wv_t, bv=bv, wo_t=wo_t, bo=bo)

    # forward treats x as (batch_size, seq_len) with seq_len == embed_dim
    x = jax.random.normal(ks[8], (batch, embed_dim), jnp.float32)

    out, attn = multi_head_self_attention(x, params, num_heads)
    jax.block_until_ready((out, attn))

    out_ref, attn_ref = reference(x, params, num_heads)
    assert out.shape == (batch, vocab_size) and attn.shape == (batch, embed_dim)
    # Tolerance accounts for the approximate EUP reciprocal (~1e-4 rel err)
    # used in the in-kernel softmax normalization.
    assert jnp.allclose(attn, attn_ref, atol=2e-3, rtol=2e-3)
    assert jnp.allclose(out, out_ref, atol=2e-3, rtol=2e-3)

    print("KERNEL_OK")
</pallas_src>

<mosaic_0001>
module attributes {stable_mosaic.version = 11 : i64} {
  func.func @_fused_mhsa_kernel(%arg0: i32, %arg1: memref<8x32xf32, #tpu.memory_space<vmem>>, %arg2: memref<32x96xf32, #tpu.memory_space<vmem>>, %arg3: memref<1x96xf32, #tpu.memory_space<vmem>>, %arg4: memref<32x64xf32, #tpu.memory_space<vmem>>, %arg5: memref<1x64xf32, #tpu.memory_space<vmem>>, %arg6: memref<8x128xf32, #tpu.memory_space<vmem>>) attributes {dimension_semantics = [#tpu.dimension_semantics<arbitrary>], iteration_bounds = array<i64: 1>, scalar_prefetch = 0 : i64, scratch_operands = 0 : i64, tpu.core_type = #tpu.core_type<tc>, window_params = [{pipeline_mode = #tpu.pipeline_mode<synchronous>, transform_indices = @transform_0, window_bounds = array<i64: 8, 32>}, {pipeline_mode = #tpu.pipeline_mode<synchronous>, transform_indices = @transform_1, window_bounds = array<i64: 32, 96>}, {pipeline_mode = #tpu.pipeline_mode<synchronous>, transform_indices = @transform_2, window_bounds = array<i64: 1, 96>}, {pipeline_mode = #tpu.pipeline_mode<synchronous>, transform_indices = @transform_3, window_bounds = array<i64: 32, 64>}, {pipeline_mode = #tpu.pipeline_mode<synchronous>, transform_indices = @transform_4, window_bounds = array<i64: 1, 64>}, {pipeline_mode = #tpu.pipeline_mode<synchronous>, transform_indices = @transform_5, window_bounds = array<i64: 8, 128>}]} {
    %c0 = arith.constant 0 : index
    %c0_0 = arith.constant 0 : index
    %0 = vector.load %arg1[%c0, %c0_0] : memref<8x32xf32, #tpu.memory_space<vmem>>, vector<8x32xf32>
    %c0_1 = arith.constant 0 : index
    %c0_2 = arith.constant 0 : index
    %1 = vector.load %arg2[%c0_1, %c0_2] : memref<32x96xf32, #tpu.memory_space<vmem>>, vector<32x96xf32>
    %cst = arith.constant dense<0.000000e+00> : vector<8x96xf32>
    %2 = tpu.matmul %0, %1, %cst {dimension_numbers = #tpu.dot_dimension_numbers<[1], [0], [0], [1], [0, 0, 1, 1], [], []>} : vector<8x32xf32>, vector<32x96xf32>, vector<8x96xf32> -> vector<8x96xf32>
    %c0_3 = arith.constant 0 : index
    %c0_4 = arith.constant 0 : index
    %3 = vector.load %arg3[%c0_3, %c0_4] : memref<1x96xf32, #tpu.memory_space<vmem>>, vector<1x96xf32>
    %4 = vector.broadcast %3 : vector<1x96xf32> to vector<8x96xf32>
    %5 = arith.addf %2, %4 : vector<8x96xf32>
    %6 = vector.extract_strided_slice %5 {offsets = [0, 0], sizes = [8, 32], strides = [1, 1]} : vector<8x96xf32> to vector<8x32xf32>
    %cst_5 = arith.constant 1.250000e-01 : f32
    %7 = vector.broadcast %cst_5 : f32 to vector<8x32xf32>
    %8 = arith.mulf %6, %7 : vector<8x32xf32>
    %9 = vector.extract_strided_slice %5 {offsets = [0, 32], sizes = [8, 32], strides = [1, 1]} : vector<8x96xf32> to vector<8x32xf32>
    %10 = vector.extract_strided_slice %5 {offsets = [0, 64], sizes = [8, 32], strides = [1, 1]} : vector<8x96xf32> to vector<8x32xf32>
    %11 = vector.extract_strided_slice %8 {offsets = [0, 0], sizes = [8, 8], strides = [1, 1]} : vector<8x32xf32> to vector<8x8xf32>
    %12 = vector.extract_strided_slice %8 {offsets = [0, 8], sizes = [8, 8], strides = [1, 1]} : vector<8x32xf32> to vector<8x8xf32>
    %13 = vector.extract_strided_slice %8 {offsets = [0, 16], sizes = [8, 8], strides = [1, 1]} : vector<8x32xf32> to vector<8x8xf32>
    %14 = vector.extract_strided_slice %8 {offsets = [0, 24], sizes = [8, 8], strides = [1, 1]} : vector<8x32xf32> to vector<8x8xf32>
    %15 = vector.extract_strided_slice %9 {offsets = [0, 0], sizes = [8, 8], strides = [1, 1]} : vector<8x32xf32> to vector<8x8xf32>
    %16 = vector.extract_strided_slice %9 {offsets = [0, 8], sizes = [8, 8], strides = [1, 1]} : vector<8x32xf32> to vector<8x8xf32>
    %17 = vector.extract_strided_slice %9 {offsets = [0, 16], sizes = [8, 8], strides = [1, 1]} : vector<8x32xf32> to vector<8x8xf32>
    %18 = vector.extract_strided_slice %9 {offsets = [0, 24], sizes = [8, 8], strides = [1, 1]} : vector<8x32xf32> to vector<8x8xf32>
    %19 = vector.extract_strided_slice %10 {offsets = [0, 0], sizes = [8, 8], strides = [1, 1]} : vector<8x32xf32> to vector<8x8xf32>
    %20 = vector.extract_strided_slice %10 {offsets = [0, 8], sizes = [8, 8], strides = [1, 1]} : vector<8x32xf32> to vector<8x8xf32>
    %21 = vector.extract_strided_slice %10 {offsets = [0, 16], sizes = [8, 8], strides = [1, 1]} : vector<8x32xf32> to vector<8x8xf32>
    %22 = vector.extract_strided_slice %10 {offsets = [0, 24], sizes = [8, 8], strides = [1, 1]} : vector<8x32xf32> to vector<8x8xf32>
    %23 = arith.mulf %11, %15 : vector<8x8xf32>
    %cst_6 = arith.constant dense<0.000000e+00> : vector<8xf32>
    %24 = vector.multi_reduction <add>, %23, %cst_6 [1] : vector<8x8xf32> to vector<8xf32>
    %25 = vector.shape_cast %24 : vector<8xf32> to vector<8x1xf32>
    %26 = arith.mulf %11, %16 : vector<8x8xf32>
    %cst_7 = arith.constant dense<0.000000e+00> : vector<8xf32>
    %27 = vector.multi_reduction <add>, %26, %cst_7 [1] : vector<8x8xf32> to vector<8xf32>
    %28 = vector.shape_cast %27 : vector<8xf32> to vector<8x1xf32>
    %29 = arith.mulf %11, %17 : vector<8x8xf32>
    %cst_8 = arith.constant dense<0.000000e+00> : vector<8xf32>
    %30 = vector.multi_reduction <add>, %29, %cst_8 [1] : vector<8x8xf32> to vector<8xf32>
    %31 = vector.shape_cast %30 : vector<8xf32> to vector<8x1xf32>
    %32 = arith.mulf %11, %18 : vector<8x8xf32>
    %cst_9 = arith.constant dense<0.000000e+00> : vector<8xf32>
    %33 = vector.multi_reduction <add>, %32, %cst_9 [1] : vector<8x8xf32> to vector<8xf32>
    %34 = vector.shape_cast %33 : vector<8xf32> to vector<8x1xf32>
    %35 = arith.maximumf %25, %28 : vector<8x1xf32>
    %36 = arith.maximumf %35, %31 : vector<8x1xf32>
    %37 = arith.maximumf %36, %34 : vector<8x1xf32>
    %38 = arith.subf %25, %37 : vector<8x1xf32>
    %39 = math.exp %38 : vector<8x1xf32>
    %40 = arith.subf %28, %37 : vector<8x1xf32>
    %41 = math.exp %40 : vector<8x1xf32>
    %42 = arith.subf %31, %37 : vector<8x1xf32>
    %43 = math.exp %42 : vector<8x1xf32>
    %44 = arith.subf %34, %37 : vector<8x1xf32>
    %45 = math.exp %44 : vector<8x1xf32>
    %46 = arith.addf %39, %41 : vector<8x1xf32>
    %47 = arith.addf %46, %43 : vector<8x1xf32>
    %48 = arith.addf %47, %45 : vector<8x1xf32>
    %49 = tpu.reciprocal %48 {approx = true} : vector<8x1xf32> -> vector<8x1xf32>
    %50 = arith.mulf %39, %49 : vector<8x1xf32>
    %51 = vector.broadcast %50 : vector<8x1xf32> to vector<8x8xf32>
    %52 = arith.mulf %51, %19 : vector<8x8xf32>
    %53 = arith.mulf %41, %49 : vector<8x1xf32>
    %54 = vector.broadcast %53 : vector<8x1xf32> to vector<8x8xf32>
    %55 = arith.mulf %54, %20 : vector<8x8xf32>
    %56 = arith.addf %52, %55 : vector<8x8xf32>
    %57 = arith.mulf %43, %49 : vector<8x1xf32>
    %58 = vector.broadcast %57 : vector<8x1xf32> to vector<8x8xf32>
    %59 = arith.mulf %58, %21 : vector<8x8xf32>
    %60 = arith.addf %56, %59 : vector<8x8xf32>
    %61 = arith.mulf %45, %49 : vector<8x1xf32>
    %62 = vector.broadcast %61 : vector<8x1xf32> to vector<8x8xf32>
    %63 = arith.mulf %62, %22 : vector<8x8xf32>
    %64 = arith.addf %60, %63 : vector<8x8xf32>
    %65 = arith.mulf %12, %15 : vector<8x8xf32>
    %cst_10 = arith.constant dense<0.000000e+00> : vector<8xf32>
    %66 = vector.multi_reduction <add>, %65, %cst_10 [1] : vector<8x8xf32> to vector<8xf32>
    %67 = vector.shape_cast %66 : vector<8xf32> to vector<8x1xf32>
    %68 = arith.mulf %12, %16 : vector<8x8xf32>
    %cst_11 = arith.constant dense<0.000000e+00> : vector<8xf32>
    %69 = vector.multi_reduction <add>, %68, %cst_11 [1] : vector<8x8xf32> to vector<8xf32>
    %70 = vector.shape_cast %69 : vector<8xf32> to vector<8x1xf32>
    %71 = arith.mulf %12, %17 : vector<8x8xf32>
    %cst_12 = arith.constant dense<0.000000e+00> : vector<8xf32>
    %72 = vector.multi_reduction <add>, %71, %cst_12 [1] : vector<8x8xf32> to vector<8xf32>
    %73 = vector.shape_cast %72 : vector<8xf32> to vector<8x1xf32>
    %74 = arith.mulf %12, %18 : vector<8x8xf32>
    %cst_13 = arith.constant dense<0.000000e+00> : vector<8xf32>
    %75 = vector.multi_reduction <add>, %74, %cst_13 [1] : vector<8x8xf32> to vector<8xf32>
    %76 = vector.shape_cast %75 : vector<8xf32> to vector<8x1xf32>
    %77 = arith.maximumf %67, %70 : vector<8x1xf32>
    %78 = arith.maximumf %77, %73 : vector<8x1xf32>
    %79 = arith.maximumf %78, %76 : vector<8x1xf32>
    %80 = arith.subf %67, %79 : vector<8x1xf32>
    %81 = math.exp %80 : vector<8x1xf32>
    %82 = arith.subf %70, %79 : vector<8x1xf32>
    %83 = math.exp %82 : vector<8x1xf32>
    %84 = arith.subf %73, %79 : vector<8x1xf32>
    %85 = math.exp %84 : vector<8x1xf32>
    %86 = arith.subf %76, %79 : vector<8x1xf32>
    %87 = math.exp %86 : vector<8x1xf32>
    %88 = arith.addf %81, %83 : vector<8x1xf32>
    %89 = arith.addf %88, %85 : vector<8x1xf32>
    %90 = arith.addf %89, %87 : vector<8x1xf32>
    %91 = tpu.reciprocal %90 {approx = true} : vector<8x1xf32> -> vector<8x1xf32>
    %92 = arith.mulf %81, %91 : vector<8x1xf32>
    %93 = vector.broadcast %92 : vector<8x1xf32> to vector<8x8xf32>
    %94 = arith.mulf %93, %19 : vector<8x8xf32>
    %95 = arith.mulf %83, %91 : vector<8x1xf32>
    %96 = vector.broadcast %95 : vector<8x1xf32> to vector<8x8xf32>
    %97 = arith.mulf %96, %20 : vector<8x8xf32>
    %98 = arith.addf %94, %97 : vector<8x8xf32>
    %99 = arith.mulf %85, %91 : vector<8x1xf32>
    %100 = vector.broadcast %99 : vector<8x1xf32> to vector<8x8xf32>
    %101 = arith.mulf %100, %21 : vector<8x8xf32>
    %102 = arith.addf %98, %101 : vector<8x8xf32>
    %103 = arith.mulf %87, %91 : vector<8x1xf32>
    %104 = vector.broadcast %103 : vector<8x1xf32> to vector<8x8xf32>
    %105 = arith.mulf %104, %22 : vector<8x8xf32>
    %106 = arith.addf %102, %105 : vector<8x8xf32>
    %107 = arith.mulf %13, %15 : vector<8x8xf32>
    %cst_14 = arith.constant dense<0.000000e+00> : vector<8xf32>
    %108 = vector.multi_reduction <add>, %107, %cst_14 [1] : vector<8x8xf32> to vector<8xf32>
    %109 = vector.shape_cast %108 : vector<8xf32> to vector<8x1xf32>
    %110 = arith.mulf %13, %16 : vector<8x8xf32>
    %cst_15 = arith.constant dense<0.000000e+00> : vector<8xf32>
    %111 = vector.multi_reduction <add>, %110, %cst_15 [1] : vector<8x8xf32> to vector<8xf32>
    %112 = vector.shape_cast %111 : vector<8xf32> to vector<8x1xf32>
    %113 = arith.mulf %13, %17 : vector<8x8xf32>
    %cst_16 = arith.constant dense<0.000000e+00> : vector<8xf32>
    %114 = vector.multi_reduction <add>, %113, %cst_16 [1] : vector<8x8xf32> to vector<8xf32>
    %115 = vector.shape_cast %114 : vector<8xf32> to vector<8x1xf32>
    %116 = arith.mulf %13, %18 : vector<8x8xf32>
    %cst_17 = arith.constant dense<0.000000e+00> : vector<8xf32>
    %117 = vector.multi_reduction <add>, %116, %cst_17 [1] : vector<8x8xf32> to vector<8xf32>
    %118 = vector.shape_cast %117 : vector<8xf32> to vector<8x1xf32>
    %119 = arith.maximumf %109, %112 : vector<8x1xf32>
    %120 = arith.maximumf %119, %115 : vector<8x1xf32>
    %121 = arith.maximumf %120, %118 : vector<8x1xf32>
    %122 = arith.subf %109, %121 : vector<8x1xf32>
    %123 = math.exp %122 : vector<8x1xf32>
    %124 = arith.subf %112, %121 : vector<8x1xf32>
    %125 = math.exp %124 : vector<8x1xf32>
    %126 = arith.subf %115, %121 : vector<8x1xf32>
    %127 = math.exp %126 : vector<8x1xf32>
    %128 = arith.subf %118, %121 : vector<8x1xf32>
    %129 = math.exp %128 : vector<8x1xf32>
    %130 = arith.addf %123, %125 : vector<8x1xf32>
    %131 = arith.addf %130, %127 : vector<8x1xf32>
    %132 = arith.addf %131, %129 : vector<8x1xf32>
    %133 = tpu.reciprocal %132 {approx = true} : vector<8x1xf32> -> vector<8x1xf32>
    %134 = arith.mulf %123, %133 : vector<8x1xf32>
    %135 = vector.broadcast %134 : vector<8x1xf32> to vector<8x8xf32>
    %136 = arith.mulf %135, %19 : vector<8x8xf32>
    %137 = arith.mulf %125, %133 : vector<8x1xf32>
    %138 = vector.broadcast %137 : vector<8x1xf32> to vector<8x8xf32>
    %139 = arith.mulf %138, %20 : vector<8x8xf32>
    %140 = arith.addf %136, %139 : vector<8x8xf32>
    %141 = arith.mulf %127, %133 : vector<8x1xf32>
    %142 = vector.broadcast %141 : vector<8x1xf32> to vector<8x8xf32>
    %143 = arith.mulf %142, %21 : vector<8x8xf32>
    %144 = arith.addf %140, %143 : vector<8x8xf32>
    %145 = arith.mulf %129, %133 : vector<8x1xf32>
    %146 = vector.broadcast %145 : vector<8x1xf32> to vector<8x8xf32>
    %147 = arith.mulf %146, %22 : vector<8x8xf32>
    %148 = arith.addf %144, %147 : vector<8x8xf32>
    %149 = arith.mulf %14, %15 : vector<8x8xf32>
    %cst_18 = arith.constant dense<0.000000e+00> : vector<8xf32>
    %150 = vector.multi_reduction <add>, %149, %cst_18 [1] : vector<8x8xf32> to vector<8xf32>
    %151 = vector.shape_cast %150 : vector<8xf32> to vector<8x1xf32>
    %152 = arith.mulf %14, %16 : vector<8x8xf32>
    %cst_19 = arith.constant dense<0.000000e+00> : vector<8xf32>
    %153 = vector.multi_reduction <add>, %152, %cst_19 [1] : vector<8x8xf32> to vector<8xf32>
    %154 = vector.shape_cast %153 : vector<8xf32> to vector<8x1xf32>
    %155 = arith.mulf %14, %17 : vector<8x8xf32>
    %cst_20 = arith.constant dense<0.000000e+00> : vector<8xf32>
    %156 = vector.multi_reduction <add>, %155, %cst_20 [1] : vector<8x8xf32> to vector<8xf32>
    %157 = vector.shape_cast %156 : vector<8xf32> to vector<8x1xf32>
    %158 = arith.mulf %14, %18 : vector<8x8xf32>
    %cst_21 = arith.constant dense<0.000000e+00> : vector<8xf32>
    %159 = vector.multi_reduction <add>, %158, %cst_21 [1] : vector<8x8xf32> to vector<8xf32>
    %160 = vector.shape_cast %159 : vector<8xf32> to vector<8x1xf32>
    %161 = arith.maximumf %151, %154 : vector<8x1xf32>
    %162 = arith.maximumf %161, %157 : vector<8x1xf32>
    %163 = arith.maximumf %162, %160 : vector<8x1xf32>
    %164 = arith.subf %151, %163 : vector<8x1xf32>
    %165 = math.exp %164 : vector<8x1xf32>
    %166 = arith.subf %154, %163 : vector<8x1xf32>
    %167 = math.exp %166 : vector<8x1xf32>
    %168 = arith.subf %157, %163 : vector<8x1xf32>
    %169 = math.exp %168 : vector<8x1xf32>
    %170 = arith.subf %160, %163 : vector<8x1xf32>
    %171 = math.exp %170 : vector<8x1xf32>
    %172 = arith.addf %165, %167 : vector<8x1xf32>
    %173 = arith.addf %172, %169 : vector<8x1xf32>
    %174 = arith.addf %173, %171 : vector<8x1xf32>
    %175 = tpu.reciprocal %174 {approx = true} : vector<8x1xf32> -> vector<8x1xf32>
    %176 = arith.mulf %165, %175 : vector<8x1xf32>
    %177 = vector.broadcast %176 : vector<8x1xf32> to vector<8x8xf32>
    %178 = arith.mulf %177, %19 : vector<8x8xf32>
    %179 = arith.mulf %167, %175 : vector<8x1xf32>
    %180 = vector.broadcast %179 : vector<8x1xf32> to vector<8x8xf32>
    %181 = arith.mulf %180, %20 : vector<8x8xf32>
    %182 = arith.addf %178, %181 : vector<8x8xf32>
    %183 = arith.mulf %169, %175 : vector<8x1xf32>
    %184 = vector.broadcast %183 : vector<8x1xf32> to vector<8x8xf32>
    %185 = arith.mulf %184, %21 : vector<8x8xf32>
    %186 = arith.addf %182, %185 : vector<8x8xf32>
    %187 = arith.mulf %171, %175 : vector<8x1xf32>
    %188 = vector.broadcast %187 : vector<8x1xf32> to vector<8x8xf32>
    %189 = arith.mulf %188, %22 : vector<8x8xf32>
    %190 = arith.addf %186, %189 : vector<8x8xf32>
    %191 = tpu.concatenate %64, %106, %148, %190 in 1 : vector<8x8xf32>, vector<8x8xf32>, vector<8x8xf32>, vector<8x8xf32> -> vector<8x32xf32>
    %c0_22 = arith.constant 0 : index
    %c0_23 = arith.constant 0 : index
    %192 = vector.load %arg4[%c0_22, %c0_23] : memref<32x64xf32, #tpu.memory_space<vmem>>, vector<32x64xf32>
    %cst_24 = arith.constant dense<0.000000e+00> : vector<8x64xf32>
    %193 = tpu.matmul %191, %192, %cst_24 {dimension_numbers = #tpu.dot_dimension_numbers<[1], [0], [0], [1], [0, 0, 1, 1], [], []>} : vector<8x32xf32>, vector<32x64xf32>, vector<8x64xf32> -> vector<8x64xf32>
    %c0_25 = arith.constant 0 : index
    %c0_26 = arith.constant 0 : index
    %194 = vector.load %arg5[%c0_25, %c0_26] : memref<1x64xf32, #tpu.memory_space<vmem>>, vector<1x64xf32>
    %195 = vector.broadcast %194 : vector<1x64xf32> to vector<8x64xf32>
    %196 = arith.addf %193, %195 : vector<8x64xf32>
    %cst_27 = arith.constant 0.000000e+00 : f32
    %197 = vector.broadcast %cst_27 : f32 to vector<8x32xf32>
    %198 = tpu.concatenate %191, %196, %197 in 1 : vector<8x32xf32>, vector<8x64xf32>, vector<8x32xf32> -> vector<8x128xf32>
    %c0_28 = arith.constant 0 : index
    %c0_29 = arith.constant 0 : index
    %199 = vector.load %arg6[%c0_28, %c0_29] : memref<8x128xf32, #tpu.memory_space<vmem>>, vector<8x128xf32>
    tpu.vector_store %arg6[%c0_28, %c0_29], %198 {strides = array<i32>} : memref<8x128xf32, #tpu.memory_space<vmem>>, vector<8x128xf32>,
    return
  }
  func.func @transform_0(%arg0: i32) -> (i32, i32) {
    %c0_i32 = arith.constant 0 : i32
    %c0_i32_0 = arith.constant 0 : i32
    %c0_i32_1 = arith.constant 0 : i32
    return %c0_i32, %c0_i32_0 : i32, i32
  }
  func.func @transform_1(%arg0: i32) -> (i32, i32) {
    %c0_i32 = arith.constant 0 : i32
    %c0_i32_0 = arith.constant 0 : i32
    %c0_i32_1 = arith.constant 0 : i32
    return %c0_i32, %c0_i32_0 : i32, i32
  }
  func.func @transform_2(%arg0: i32) -> (i32, i32) {
    %c0_i32 = arith.constant 0 : i32
    %c0_i32_0 = arith.constant 0 : i32
    %c0_i32_1 = arith.constant 0 : i32
    return %c0_i32, %c0_i32_0 : i32, i32
  }
  func.func @transform_3(%arg0: i32) -> (i32, i32) {
    %c0_i32 = arith.constant 0 : i32
    %c0_i32_0 = arith.constant 0 : i32
    %c0_i32_1 = arith.constant 0 : i32
    return %c0_i32, %c0_i32_0 : i32, i32
  }
  func.func @transform_4(%arg0: i32) -> (i32, i32) {
    %c0_i32 = arith.constant 0 : i32
    %c0_i32_0 = arith.constant 0 : i32
    %c0_i32_1 = arith.constant 0 : i32
    return %c0_i32, %c0_i32_0 : i32, i32
  }
  func.func @transform_5(%arg0: i32) -> (i32, i32) {
    %c0_i32 = arith.constant 0 : i32
    %c0_i32_0 = arith.constant 0 : i32
    %c0_i32_1 = arith.constant 0 : i32
    return %c0_i32, %c0_i32_0 : i32, i32
  }
}

</mosaic_0001>

<llo_original>
// kernel: tpu_custom_call.1
$region0: #{tpu_custom_call.1}
  #allocation0 [shape = 'u32[]', space=smem, size = 0x4, offset = 0x4, fixed_abs, tag = 'smem constant byte address 0x4 - core index']
  #allocation1 [shape = 'u32[72,128]{1,0:T(1,128)}', space=vmem, size = 0x9000, scoped, tag = 'internal scratch']
  %s0 = inlined_call_operand.hbm [shape: f32[8,32], index: 0, kind: input, shape index: {}]
  %s1 = inlined_call_operand.hbm [shape: f32[32,96], index: 1, kind: input, shape index: {}]
  %s2 = inlined_call_operand.vmem [shape: f32[1,96], index: 2, kind: input, shape index: {}]
  %s3 = inlined_call_operand.hbm [shape: f32[32,64], index: 3, kind: input, shape index: {}]
  %s4 = inlined_call_operand.vmem [shape: f32[1,64], index: 4, kind: input, shape index: {}]
  %s5 = inlined_call_operand.hbm [shape: f32[8,128], index: 5, kind: output, shape index: {}]
  %s6 = sld [smem:[#allocation0]]
  $region42: #{tpu_custom_call.1} parent=0
    _
  %s8 = ssub.s32 1, %s6
  %s9 = scalar_select 0, %s8, %s6
  $region1: #{tpu_custom_call.1} parent=0
    #allocation2 [shape = 'u8[4096]{0}', space=vmem, size = 0x1000, scoped, tag = 'input window, operand 0, single buffered']
    #allocation3 [shape = 's32[1]{0}', space=sflag, size = 0x4, scoped, tag = 'scoped memory for tpu_custom_call.1']
    #allocation4 [shape = 's32[1]{0}', space=sflag, size = 0x4, scoped, tag = 'scoped memory for tpu_custom_call.1']
    #allocation5 [shape = 'u8[16384]{0}', space=vmem, size = 0x4000, scoped, tag = 'input window, operand 1, single buffered']
    #allocation6 [shape = 's32[1]{0}', space=sflag, size = 0x4, scoped, tag = 'scoped memory for tpu_custom_call.1']
    #allocation7 [shape = 'u8[16384]{0}', space=vmem, size = 0x4000, scoped, tag = 'input window, operand 3, single buffered']
    #allocation8 [shape = 'u8[4096]{0}', space=vmem, size = 0x1000, scoped, tag = 'output window, operand 0, single buffered']
    %10 = vsyncpa [#allocation3], 0
    %11 = vsyncpa [#allocation6], 0
    %12 = vsyncpa [#allocation4], 0
    // Predicated region
    $region2: #{tpu_custom_call.1} parent=1 // pred_check
      _
    $region3: #{tpu_custom_call.1} parent=1 // pred_check_branch
      %14 = sbr.rel (0) target = $region5
    $region4: #{tpu_custom_call.1} parent=1 // pred_region
      %16 = vsyncadd [#allocation3], 0
      %s18 = sshll.u32 %s0, 4
      %s19 = int_to_ptr.hbm [resolvable:$true] %s18
      %s20 = sshll.u32 [#allocation2], 4
      %s21 = int_to_ptr.vmem [resolvable:$true] %s20
      %23 = dma.hbm_to_vmem [thread:$0]  %s19, 128, %s21, [#allocation3]
    $region5: #{tpu_custom_call.1} parent=1 // pred_fallthru
      _
    // Predicated region
    $region6: #{tpu_custom_call.1} parent=1 // pred_check
      _
    $region7: #{tpu_custom_call.1} parent=1 // pred_check_branch
      %25 = sbr.rel (0) target = $region9
    $region8: #{tpu_custom_call.1} parent=1 // pred_region
      %27 = vsyncadd [#allocation6], 0
      %s28 = sshll.u32 %s1, 4
      %s29 = int_to_ptr.hbm [resolvable:$true] %s28
      %s30 = sshll.u32 [#allocation5], 4
      %s31 = int_to_ptr.vmem [resolvable:$true] %s30
      %36 = dma.hbm_to_vmem [thread:$0]  %s29, 512, %s31, [#allocation6], 128, 128, 8
    $region9: #{tpu_custom_call.1} parent=1 // pred_fallthru
      _
    // Predicated region
    $region10: #{tpu_custom_call.1} parent=1 // pred_check
      _
    $region11: #{tpu_custom_call.1} parent=1 // pred_check_branch
      %38 = sbr.rel (0) target = $region13
    $region12: #{tpu_custom_call.1} parent=1 // pred_region
      _
    $region13: #{tpu_custom_call.1} parent=1 // pred_fallthru
      _
    // Predicated region
    $region14: #{tpu_custom_call.1} parent=1 // pred_check
      _
    $region15: #{tpu_custom_call.1} parent=1 // pred_check_branch
      %40 = sbr.rel (0) target = $region17
    $region16: #{tpu_custom_call.1} parent=1 // pred_region
      %42 = vsyncadd [#allocation6], 0
      %s43 = sshll.u32 %s3, 4
      %s44 = int_to_ptr.hbm [resolvable:$true] %s43
      %s45 = sshll.u32 [#allocation7], 4
      %s46 = int_to_ptr.vmem [resolvable:$true] %s45
      %51 = dma.hbm_to_vmem [thread:$0]  %s44, 512, %s46, [#allocation6], 128, 128, 8
    $region17: #{tpu_custom_call.1} parent=1 // pred_fallthru
      _
    // Predicated region
    $region18: #{tpu_custom_call.1} parent=1 // pred_check
      _
    $region19: #{tpu_custom_call.1} parent=1 // pred_check_branch
      %53 = sbr.rel (0) target = $region21
    $region20: #{tpu_custom_call.1} parent=1 // pred_region
      _
    $region21: #{tpu_custom_call.1} parent=1 // pred_fallthru
      _
    // Predicated region
    $region22: #{tpu_custom_call.1} parent=1 // pred_check
      _
    $region23: #{tpu_custom_call.1} parent=1 // pred_check_branch
      %55 = sbr.rel (0) target = $region25
    $region24: #{tpu_custom_call.1} parent=1 // pred_region
      %57 = dma.done [#allocation3], 128
    $region25: #{tpu_custom_call.1} parent=1 // pred_fallthru
      _
    // Predicated region
    $region26: #{tpu_custom_call.1} parent=1 // pred_check
      _
    $region27: #{tpu_custom_call.1} parent=1 // pred_check_branch
      %59 = sbr.rel (0) target = $region29
    $region28: #{tpu_custom_call.1} parent=1 // pred_region
      %61 = dma.done [#allocation6], 512
    $region29: #{tpu_custom_call.1} parent=1 // pred_fallthru
      _
    // Predicated region
    $region30: #{tpu_custom_call.1} parent=1 // pred_check
      _
    $region31: #{tpu_custom_call.1} parent=1 // pred_check_branch
      %63 = sbr.rel (0) target = $region33
    $region32: #{tpu_custom_call.1} parent=1 // pred_region
      %65 = dma.done [#allocation6], 512
    $region33: #{tpu_custom_call.1} parent=1 // pred_fallthru
      _
    %v66 = vld [vmem:[#allocation2] sm:$0xff]
    %v67 = vld [vmem:[#allocation5] sm:$0xff]
    %v68 = vld [vmem:[#allocation5 + $0x8] sm:$0xff]
    %v69 = vld [vmem:[#allocation5 + $0x10] sm:$0xff]
    %v70 = vld [vmem:[#allocation5 + $0x18] sm:$0xff]
    %v71 = vld [vmem:[%s2] sm:$0x1]
    %v73 = vperm.slane %v71, 0
    %vm75 = vcmask 261120
    %v77 = vsel %vm75, %v66, 0
    %79 = vmatpush.msra.mxu0 0.0
    %80 = vmatpush.msra.mxu0 0.0
    %81 = vmatpush.msra.mxu0 0.0
    %82 = vmatpush.msra.mxu0 0.0
    %83 = vmatpush.msra.mxu0 0.0
    %84 = vmatpush.msra.mxu0 0.0
    %85 = vmatpush.msra.mxu0 0.0
    %86 = vmatpush.msra.mxu0 0.0
    %87 = vmatpush.msra.mxu0 0.0
    %88 = vmatpush.msra.mxu0 0.0
    %89 = vmatpush.msra.mxu0 0.0
    %90 = vmatpush.msra.mxu0 0.0
    %91 = vmatpush.msra.mxu0 %v70
    %92 = vmatpush.msra.mxu0 %v69
    %93 = vmatpush.msra.mxu0 %v68
    %94 = vmatpush.msra.mxu0 %v67
    %95 = vmatmul.f32.gmra.mxu0 %v77
    %v96 = vpop.f32.mrf.mxu0
    %v97 = vadd.f32 %v73, %v96
    %98 = vdwg.mxu0
    %v99 = vmul.f32 %v97, 0.125
    %101 = vrot.lane.b32.xlu0 %v97, 96
    %v102 = vpop.permute.xlu0 %101
    %v104 = vmul.f32 %v99, %v102
    %vm105 = vcmask 64512
    %v106 = vsel %vm105, %v104, 0.0
    %107 = vadd.xlane.f32.xlu0 %v106
    %v108 = vpop.xlane.xlu0 %107
    %109 = vrot.lane.b32.xlu0 %v97, 88
    %v110 = vpop.permute.xlu0 %109
    %v112 = vmul.f32 %v99, %v110
    %v113 = vsel %vm105, %v112, 0.0
    %114 = vadd.xlane.f32.xlu0 %v113
    %v115 = vpop.xlane.xlu0 %114
    %116 = vrot.lane.b32.xlu0 %v97, 80
    %v117 = vpop.permute.xlu0 %116
    %v119 = vmul.f32 %v99, %v117
    %v120 = vsel %vm105, %v119, 0.0
    %121 = vadd.xlane.f32.xlu0 %v120
    %v122 = vpop.xlane.xlu0 %121
    %123 = vrot.lane.b32.xlu0 %v97, 72
    %v124 = vpop.permute.xlu0 %123
    %v126 = vmul.f32 %v99, %v124
    %v127 = vsel %vm105, %v126, 0.0
    %128 = vadd.xlane.f32.xlu0 %v127
    %v129 = vpop.xlane.xlu0 %128
    %v130 = vmax.f32 %v108, %v115
    %v131 = vmax.f32 %v130, %v122
    %v132 = vmax.f32 %v131, %v129
    %v133 = vsub.f32 %v108, %v132
    %v134 = vmul.f32 %v133, 1.442695
    %v135 = vpow.pop %v134
    %v136 = vsub.f32 %v115, %v132
    %v137 = vmul.f32 %v136, 1.442695
    %v138 = vpow.pop %v137
    %v139 = vsub.f32 %v122, %v132
    %v140 = vmul.f32 %v139, 1.442695
    %v141 = vpow.pop %v140
    %v142 = vsub.f32 %v129, %v132
    %v143 = vmul.f32 %v142, 1.442695
    %v144 = vpow.pop %v143
    %v145 = vadd.f32 %v135, %v138
    %v146 = vadd.f32 %v145, %v141
    %v147 = vadd.f32 %v146, %v144
    %v148 = vrcp.pop %v147
    %v149 = vmul.f32 %v135, %v148
    %v150 = vmul.f32 %v149, %v97
    %v151 = vmul.f32 %v138, %v148
    %v152 = vmul.f32 %v151, %v97
    %154 = vrot.lane.b32.xlu0 %v152, 120
    %v155 = vpop.permute.xlu0 %154
    %v157 = vadd.f32 %v150, %v155
    %v158 = vmul.f32 %v141, %v148
    %v159 = vmul.f32 %v158, %v97
    %161 = vrot.lane.b32.xlu0 %v159, 112
    %v162 = vpop.permute.xlu0 %161
    %v164 = vadd.f32 %v157, %v162
    %v165 = vmul.f32 %v144, %v148
    %v166 = vmul.f32 %v165, %v97
    %168 = vrot.lane.b32.xlu0 %v166, 104
    %v169 = vpop.permute.xlu0 %168
    %v171 = vadd.f32 %v164, %v169
    %172 = vrot.lane.b32.xlu0 %v97, 104
    %v173 = vpop.permute.xlu0 %172
    %v175 = vmul.f32 %v99, %v173
    %177 = vrot.lane.b32.xlu0 %v175, 120
    %v178 = vpop.permute.xlu0 %177
    %v180 = vsel %vm105, %v178, 0.0
    %181 = vadd.xlane.f32.xlu0 %v180
    %v182 = vpop.xlane.xlu0 %181
    %184 = vrot.lane.b32.xlu0 %v104, 120
    %v185 = vpop.permute.xlu0 %184
    %v187 = vsel %vm105, %v185, 0.0
    %188 = vadd.xlane.f32.xlu0 %v187
    %v189 = vpop.xlane.xlu0 %188
    %191 = vrot.lane.b32.xlu0 %v112, 120
    %v192 = vpop.permute.xlu0 %191
    %v194 = vsel %vm105, %v192, 0.0
    %195 = vadd.xlane.f32.xlu0 %v194
    %v196 = vpop.xlane.xlu0 %195
    %198 = vrot.lane.b32.xlu0 %v119, 120
    %v199 = vpop.permute.xlu0 %198
    %v201 = vsel %vm105, %v199, 0.0
    %202 = vadd.xlane.f32.xlu0 %v201
    %v203 = vpop.xlane.xlu0 %202
    %v204 = vmax.f32 %v182, %v189
    %v205 = vmax.f32 %v204, %v196
    %v206 = vmax.f32 %v205, %v203
    %v207 = vsub.f32 %v182, %v206
    %v208 = vmul.f32 %v207, 1.442695
    %v209 = vpow.pop %v208
    %v210 = vsub.f32 %v189, %v206
    %v211 = vmul.f32 %v210, 1.442695
    %v212 = vpow.pop %v211
    %v213 = vsub.f32 %v196, %v206
    %v214 = vmul.f32 %v213, 1.442695
    %v215 = vpow.pop %v214
    %v216 = vsub.f32 %v203, %v206
    %v217 = vmul.f32 %v216, 1.442695
    %v218 = vpow.pop %v217
    %v219 = vadd.f32 %v209, %v212
    %v220 = vadd.f32 %v219, %v215
    %v221 = vadd.f32 %v220, %v218
    %v222 = vrcp.pop %v221
    %v223 = vmul.f32 %v209, %v222
    %v224 = vmul.f32 %v223, %v97
    %v225 = vmul.f32 %v212, %v222
    %v226 = vmul.f32 %v225, %v97
    %228 = vrot.lane.b32.xlu0 %v226, 120
    %v229 = vpop.permute.xlu0 %228
    %v231 = vadd.f32 %v224, %v229
    %v232 = vmul.f32 %v215, %v222
    %v233 = vmul.f32 %v232, %v97
    %235 = vrot.lane.b32.xlu0 %v233, 112
    %v236 = vpop.permute.xlu0 %235
    %v238 = vadd.f32 %v231, %v236
    %v239 = vmul.f32 %v218, %v222
    %v240 = vmul.f32 %v239, %v97
    %242 = vrot.lane.b32.xlu0 %v240, 104
    %v243 = vpop.permute.xlu0 %242
    %v245 = vadd.f32 %v238, %v243
    %246 = vrot.lane.b32.xlu0 %v97, 112
    %v247 = vpop.permute.xlu0 %246
    %v249 = vmul.f32 %v99, %v247
    %251 = vrot.lane.b32.xlu0 %v249, 112
    %v252 = vpop.permute.xlu0 %251
    %v254 = vsel %vm105, %v252, 0.0
    %255 = vadd.xlane.f32.xlu0 %v254
    %v256 = vpop.xlane.xlu0 %255
    %257 = vrot.lane.b32.xlu0 %v175, 112
    %v258 = vpop.permute.xlu0 %257
    %v260 = vsel %vm105, %v258, 0.0
    %261 = vadd.xlane.f32.xlu0 %v260
    %v262 = vpop.xlane.xlu0 %261
    %263 = vrot.lane.b32.xlu0 %v104, 112
    %v264 = vpop.permute.xlu0 %263
    %v266 = vsel %vm105, %v264, 0.0
    %267 = vadd.xlane.f32.xlu0 %v266
    %v268 = vpop.xlane.xlu0 %267
    %269 = vrot.lane.b32.xlu0 %v112, 112
    %v270 = vpop.permute.xlu0 %269
    %v272 = vsel %vm105, %v270, 0.0
    %273 = vadd.xlane.f32.xlu0 %v272
    %v274 = vpop.xlane.xlu0 %273
    %v275 = vmax.f32 %v256, %v262
    %v276 = vmax.f32 %v275, %v268
    %v277 = vmax.f32 %v276, %v274
    %v278 = vsub.f32 %v256, %v277
    %v279 = vmul.f32 %v278, 1.442695
    %v280 = vpow.pop %v279
    %v281 = vsub.f32 %v262, %v277
    %v282 = vmul.f32 %v281, 1.442695
    %v283 = vpow.pop %v282
    %v284 = vsub.f32 %v268, %v277
    %v285 = vmul.f32 %v284, 1.442695
    %v286 = vpow.pop %v285
    %v287 = vsub.f32 %v274, %v277
    %v288 = vmul.f32 %v287, 1.442695
    %v289 = vpow.pop %v288
    %v290 = vadd.f32 %v280, %v283
    %v291 = vadd.f32 %v290, %v286
    %v292 = vadd.f32 %v291, %v289
    %v293 = vrcp.pop %v292
    %v294 = vmul.f32 %v280, %v293
    %v295 = vmul.f32 %v294, %v97
    %v296 = vmul.f32 %v283, %v293
    %v297 = vmul.f32 %v296, %v97
    %299 = vrot.lane.b32.xlu0 %v297, 120
    %v300 = vpop.permute.xlu0 %299
    %v302 = vadd.f32 %v295, %v300
    %v303 = vmul.f32 %v286, %v293
    %v304 = vmul.f32 %v303, %v97
    %306 = vrot.lane.b32.xlu0 %v304, 112
    %v307 = vpop.permute.xlu0 %306
    %v309 = vadd.f32 %v302, %v307
    %v310 = vmul.f32 %v289, %v293
    %v311 = vmul.f32 %v310, %v97
    %313 = vrot.lane.b32.xlu0 %v311, 104
    %v314 = vpop.permute.xlu0 %313
    %v316 = vadd.f32 %v309, %v314
    %317 = vrot.lane.b32.xlu0 %v97, 120
    %v318 = vpop.permute.xlu0 %317
    %v320 = vmul.f32 %v99, %v318
    %322 = vrot.lane.b32.xlu0 %v320, 104
    %v323 = vpop.permute.xlu0 %322
    %v325 = vsel %vm105, %v323, 0.0
    %326 = vadd.xlane.f32.xlu0 %v325
    %v327 = vpop.xlane.xlu0 %326
    %328 = vrot.lane.b32.xlu0 %v249, 104
    %v329 = vpop.permute.xlu0 %328
    %v331 = vsel %vm105, %v329, 0.0
    %332 = vadd.xlane.f32.xlu0 %v331
    %v333 = vpop.xlane.xlu0 %332
    %334 = vrot.lane.b32.xlu0 %v175, 104
    %v335 = vpop.permute.xlu0 %334
    %v337 = vsel %vm105, %v335, 0.0
    %338 = vadd.xlane.f32.xlu0 %v337
    %v339 = vpop.xlane.xlu0 %338
    %340 = vrot.lane.b32.xlu0 %v104, 104
    %v341 = vpop.permute.xlu0 %340
    %v343 = vsel %vm105, %v341, 0.0
    %344 = vadd.xlane.f32.xlu0 %v343
    %v345 = vpop.xlane.xlu0 %344
    %v346 = vmax.f32 %v327, %v333
    %v347 = vmax.f32 %v346, %v339
    %v348 = vmax.f32 %v347, %v345
    %v349 = vsub.f32 %v327, %v348
    %v350 = vmul.f32 %v349, 1.442695
    %v351 = vpow.pop %v350
    %v352 = vsub.f32 %v333, %v348
    %v353 = vmul.f32 %v352, 1.442695
    %v354 = vpow.pop %v353
    %v355 = vsub.f32 %v339, %v348
    %v356 = vmul.f32 %v355, 1.442695
    %v357 = vpow.pop %v356
    %v358 = vsub.f32 %v345, %v348
    %v359 = vmul.f32 %v358, 1.442695
    %v360 = vpow.pop %v359
    %v361 = vadd.f32 %v351, %v354
    %v362 = vadd.f32 %v361, %v357
    %v363 = vadd.f32 %v362, %v360
    %v364 = vrcp.pop %v363
    %v365 = vmul.f32 %v351, %v364
    %v366 = vmul.f32 %v365, %v97
    %v367 = vmul.f32 %v354, %v364
    %v368 = vmul.f32 %v367, %v97
    %370 = vrot.lane.b32.xlu0 %v368, 120
    %v371 = vpop.permute.xlu0 %370
    %v373 = vadd.f32 %v366, %v371
    %v374 = vmul.f32 %v357, %v364
    %v375 = vmul.f32 %v374, %v97
    %377 = vrot.lane.b32.xlu0 %v375, 112
    %v378 = vpop.permute.xlu0 %377
    %v380 = vadd.f32 %v373, %v378
    %v381 = vmul.f32 %v360, %v364
    %v382 = vmul.f32 %v381, %v97
    %384 = vrot.lane.b32.xlu0 %v382, 104
    %v385 = vpop.permute.xlu0 %384
    %v387 = vadd.f32 %v380, %v385
    %389 = vrot.lane.b32.xlu0 %v171, 64
    %v390 = vpop.permute.xlu0 %389
    %393 = vrot.lane.b32.xlu0 %v245, 72
    %v394 = vpop.permute.xlu0 %393
    %397 = vrot.lane.b32.xlu0 %v316, 80
    %v398 = vpop.permute.xlu0 %397
    %401 = vrot.lane.b32.xlu0 %v387, 88
    %v402 = vpop.permute.xlu0 %401
    %v404 = vsel %vm105, %v390, %v394
    %vm405 = vcmask 130048
    %v406 = vsel %vm405, %v404, %v398
    %vm407 = vcmask 195584
    %v408 = vsel %vm407, %v406, %v402
    %v409 = vld [vmem:[#allocation7] sm:$0xff]
    %v410 = vld [vmem:[#allocation7 + $0x8] sm:$0xff]
    %v411 = vld [vmem:[#allocation7 + $0x10] sm:$0xff]
    %v412 = vld [vmem:[#allocation7 + $0x18] sm:$0xff]
    %v413 = vld [vmem:[%s4] sm:$0x1]
    %v415 = vperm.slane %v413, 0
    %v418 = vsel %vm75, %v408, 0
    %420 = vmatpush.msra.mxu0 0.0
    %421 = vmatpush.msra.mxu0 0.0
    %422 = vmatpush.msra.mxu0 0.0
    %423 = vmatpush.msra.mxu0 0.0
    %424 = vmatpush.msra.mxu0 0.0
    %425 = vmatpush.msra.mxu0 0.0
    %426 = vmatpush.msra.mxu0 0.0
    %427 = vmatpush.msra.mxu0 0.0
    %428 = vmatpush.msra.mxu0 0.0
    %429 = vmatpush.msra.mxu0 0.0
    %430 = vmatpush.msra.mxu0 0.0
    %431 = vmatpush.msra.mxu0 0.0
    %432 = vmatpush.msra.mxu0 %v412
    %433 = vmatpush.msra.mxu0 %v411
    %434 = vmatpush.msra.mxu0 %v410
    %435 = vmatpush.msra.mxu0 %v409
    %436 = vmatmul.f32.gmra.mxu0 %v418
    %v437 = vpop.f32.mrf.mxu0
    %v438 = vadd.f32 %v415, %v437
    %439 = vdwg.mxu0
    %441 = vrot.lane.b32.xlu0 %v438, 32
    %v442 = vpop.permute.xlu0 %441
    %v444 = vsel %vm75, %v408, %v442
    %vm445 = vcmask 785408
    %v446 = vsel %vm445, %v444, 0.0
    %447 = vst [vmem:[#allocation8] sm:$0xff] %v446
    // Predicated region
    $region34: #{tpu_custom_call.1} parent=1 // pred_check
      _
    $region35: #{tpu_custom_call.1} parent=1 // pred_check_branch
      %449 = sbr.rel (0) target = $region37
    $region36: #{tpu_custom_call.1} parent=1 // pred_region
      %451 = vsyncadd [#allocation4], 0
      %s453 = sshll.u32 [#allocation8], 4
      %s454 = int_to_ptr.vmem [resolvable:$true] %s453
      %s455 = sshll.u32 %s5, 4
      %s456 = int_to_ptr.hbm [resolvable:$true] %s455
      %458 = dma.vmem_to_hbm [thread:$0]  %s454, 128, %s456, [#allocation4]
    $region37: #{tpu_custom_call.1} parent=1 // pred_fallthru
      _
    // Predicated region
    $region38: #{tpu_custom_call.1} parent=1 // pred_check
      _
    $region39: #{tpu_custom_call.1} parent=1 // pred_check_branch
      %460 = sbr.rel (0) target = $region41
    $region40: #{tpu_custom_call.1} parent=1 // pred_region
      %462 = dma.done [#allocation4], 128
    $region41: #{tpu_custom_call.1} parent=1 // pred_fallthru
      _
    %463 = vsyncpa [#allocation3], 1
    %464 = vsyncpa [#allocation6], 1
    %465 = vsyncpa [#allocation4], 1

</llo_original>
